<compile_context>
chip_gen: v7x
topology: tpu7x:2x2x1
jax: 0.10.0
libtpu: 0.0.40
codegen_flags: <defaults>
</compile_context>

<pallas_src>
import functools

import jax
import jax.numpy as jnp
from jax import lax
from jax.experimental import pallas as pl
from jax.experimental.pallas import tpu as pltpu


# ----------------------------- small helpers ---------------------------------

def _round_up(x, m):
    return ((x + m - 1) // m) * m


def _vmem_budget():
    """(per-call block budget, vmem_limit cap) sized to the running chip."""
    try:
        cap = pltpu.get_tpu_info().vmem_capacity_bytes
    except Exception:  # conservative default is safe on every generation
        cap = 64 << 20
    if cap >= (100 << 20):      # v5e / v6e: 128 MiB physical VMEM per core
        return 48 << 20, 96 << 20
    return 24 << 20, 52 << 20   # v7x-like: 64 MiB physical -> leave headroom


def _vmem_limit(need_bytes, cap_bytes):
    return int(min(cap_bytes, max(32 << 20, need_bytes + (8 << 20))))


def _pick_tile(n, cap, multiple_of=1):
    """Largest divisor of n that is <= cap and a multiple of `multiple_of`."""
    cap = max(1, min(int(cap), n))
    for d in range(cap, 0, -1):
        if n % d == 0 and d % multiple_of == 0:
            return d
    return n


def _im2col_taps(x, kh, kw, sh, sw, ph, pw):
    """Stack of the kh*kw shifted views: (KT, N, C, Ho, Wo).  Plain-JAX glue."""
    N, C, H, W = x.shape
    Ho = (H + 2 * ph - kh) // sh + 1
    Wo = (W + 2 * pw - kw) // sw + 1
    x_pad = jnp.pad(x, ((0, 0), (0, 0), (ph, ph), (pw, pw)))
    taps = []
    for ki in range(kh):
        for kj in range(kw):
            taps.append(x_pad[:, :, ki:ki + sh * Ho:sh, kj:kj + sw * Wo:sw])
    return jnp.stack(taps, axis=0), Ho, Wo


# ------------------------------- kernels --------------------------------------

def _pw_bn_kernel(x_ref, w_ref, scale_ref, shift_ref, o_ref):
    # x (1, C, t_hw); w (t_co, C) bf16; scale/shift (t_co, 1) f32; o (1, t_co, t_hw).
    x = x_ref[0].astype(jnp.bfloat16)
    acc = jnp.dot(w_ref[...], x, preferred_element_type=jnp.float32)
    o_ref[0] = (acc * scale_ref[...] + shift_ref[...]).astype(o_ref.dtype)


def _dw_fused_kernel(x_ref, w_ref, shift_ref, o_ref, *, kh, kw, ho, wo):
    # x (1, t_c, Hp, Wp); w (KT, t_c, 1, Wo) f32 (BN scale folded, lane-broadcast);
    # shift (t_c, 1, Wo) f32; o (1, t_c, Ho, Wo).  Pure-VPU MAC over in-VMEM taps.
    acc = None
    for ki in range(kh):
        for kj in range(kw):
            t = ki * kw + kj
            win = x_ref[0, :, ki:ki + ho, kj:kj + wo].astype(jnp.float32)
            term = win * w_ref[t]
            acc = term if acc is None else acc + term
    o_ref[0] = (acc + shift_ref[...]).astype(o_ref.dtype)


def _dw_taps_kernel(p_ref, w_ref, shift_ref, o_ref, *, kt):
    # p (KT, tm, Cp) bf16; w (KT, 1, Cp) f32 (scale folded); shift (1, Cp) f32.
    acc = p_ref[0].astype(jnp.float32) * w_ref[0]
    for t in range(1, kt):
        acc = acc + p_ref[t].astype(jnp.float32) * w_ref[t]
    o_ref[...] = (acc + shift_ref[...]).astype(o_ref.dtype)


def _gmm_bn_kernel(p_ref, w_ref, scale_ref, shift_ref, o_ref):
    # p (1, tm, Kp) bf16; w (1, Kp, Cp) bf16; scale/shift (1, 1, Cp) f32.
    acc = jnp.dot(p_ref[0], w_ref[0], preferred_element_type=jnp.float32)
    o_ref[0] = (acc * scale_ref[0] + shift_ref[0]).astype(o_ref.dtype)


# ------------------------------- paths ----------------------------------------

def _pointwise_path(x, w2d, scale, shift, out_c, out_dtype):
    """groups==1, 1x1 (stride/pad pre-applied): NCHW-native W @ X, BN epilogue.

    x: (N, C, Ho, Wo);  w2d: (out_c, C) f32.  Returns (N, out_c, Ho, Wo)."""
    N, C, Ho, Wo = x.shape
    HW = Ho * Wo
    budget, limit_cap = _vmem_budget()
    itemsize = x.dtype.itemsize
    co_p = _round_up(out_c, 8)
    c_sub = _round_up(C, 8)

    x3 = x.reshape(N, C, HW)

    # Spatial (lane) tile: prefer the whole row (no pad / extra HBM copy of x).
    if 2 * c_sub * _round_up(HW, 128) * itemsize <= budget // 2:
        t_hw, hw_p = HW, HW
    else:
        t_hw = 1024
        while t_hw > 128 and 2 * c_sub * t_hw * itemsize > budget // 2:
            t_hw //= 2
        hw_p = _round_up(HW, t_hw)
        x3 = jnp.pad(x3, ((0, 0), (0, 0), (0, hw_p - HW)))
    lane_w = _round_up(t_hw, 128)

    x_blk = 2 * c_sub * lane_w * itemsize
    per_co = 2 * lane_w * 2 + 2 * _round_up(C, 128) * 2 + 4 * 128 * 4
    t_co = _pick_tile(co_p, max(8, (budget - x_blk) // per_co), multiple_of=8)
    # Keep >= 2 grid steps so both v7x TensorCores get work on small layers.
    if N * (hw_p // t_hw) * (co_p // t_co) < 2 and co_p > 8:
        t_co = _pick_tile(co_p, co_p // 2, multiple_of=8)

    wq = jnp.pad(w2d, ((0, co_p - out_c), (0, 0))).astype(jnp.bfloat16)   # (co_p, C)
    sc = jnp.pad(scale, (0, co_p - out_c)).reshape(co_p, 1)
    sh = jnp.pad(shift, (0, co_p - out_c)).reshape(co_p, 1)

    need = (x_blk + 2 * t_co * lane_w * 2
            + 2 * t_co * _round_up(C, 128) * 2 + 4 * t_co * 128 * 4)

    out = pl.pallas_call(
        _pw_bn_kernel,
        out_shape=jax.ShapeDtypeStruct((N, co_p, hw_p), out_dtype),
        grid_spec=pltpu.PrefetchScalarGridSpec(
            num_scalar_prefetch=0,
            grid=(N, hw_p // t_hw, co_p // t_co),
            in_specs=[
                pl.BlockSpec((1, C, t_hw), lambda n, h, c: (n, 0, h)),
                pl.BlockSpec((t_co, C), lambda n, h, c: (c, 0)),
                pl.BlockSpec((t_co, 1), lambda n, h, c: (c, 0)),
                pl.BlockSpec((t_co, 1), lambda n, h, c: (c, 0)),
            ],
            out_specs=pl.BlockSpec((1, t_co, t_hw), lambda n, h, c: (n, c, h)),
        ),
        compiler_params=pltpu.CompilerParams(
            dimension_semantics=("parallel", "parallel", "parallel"),
            vmem_limit_bytes=_vmem_limit(need, limit_cap)),
    )(x3, wq, sc, sh)

    if co_p != out_c or hw_p != HW:
        out = out[:, :out_c, :HW]
    return out.reshape(N, out_c, Ho, Wo)


def _depthwise_fused_path(x, weight, scale, shift, kh, kw, ph, pw, Ho, Wo, out_dtype):
    """groups==C, stride 1, real spatial extent: fused window extraction (no
    materialized taps), NCHW-native, W on lanes, channels tiled over the grid."""
    N, C, H, W = x.shape
    KT = kh * kw
    budget, limit_cap = _vmem_budget()
    itemsize = x.dtype.itemsize

    if ph or pw:
        x = jnp.pad(x, ((0, 0), (0, 0), (ph, ph), (pw, pw)))
    Hp, Wp = H + 2 * ph, W + 2 * pw

    # Per-channel weights with the BN scale folded in f32, pre-broadcast along
    # the lane (W) axis so the in-kernel per-tap multiply is a plain sublane
    # broadcast (no cross-layout relayout of per-channel scalars).
    wf = weight.reshape(C, KT).astype(jnp.float32) * scale[:, None]        # (C, KT)
    wb = jnp.broadcast_to(wf.T[:, :, None, None], (KT, C, 1, Wo)).astype(jnp.float32)
    shb = jnp.broadcast_to(shift.astype(jnp.float32)[:, None, None], (C, 1, Wo))

    out_isz = jnp.dtype(out_dtype).itemsize
    per_c = (2 * _round_up(Hp, 8) * _round_up(Wp, 128) * itemsize      # x blocks
             + 2 * _round_up(Ho, 8) * _round_up(Wo, 128) * out_isz     # out blocks
             + 2 * KT * 8 * _round_up(Wo, 128) * 4                     # weight blocks
             + 2 * 8 * _round_up(Wo, 128) * 4)                         # shift blocks
    t_c = _pick_tile(C, max(1, budget // per_c))
    if N * (C // t_c) < 2:        # keep both v7x cores busy when possible
        t_c = _pick_tile(C, max(1, t_c // 2))

    return pl.pallas_call(
        functools.partial(_dw_fused_kernel, kh=kh, kw=kw, ho=Ho, wo=Wo),
        out_shape=jax.ShapeDtypeStruct((N, C, Ho, Wo), out_dtype),
        grid_spec=pltpu.PrefetchScalarGridSpec(
            num_scalar_prefetch=0,
            grid=(N, C // t_c),
            in_specs=[
                pl.BlockSpec((1, t_c, Hp, Wp), lambda n, c: (n, c, 0, 0)),
                pl.BlockSpec((KT, t_c, 1, Wo), lambda n, c: (0, c, 0, 0)),
                pl.BlockSpec((t_c, 1, Wo), lambda n, c: (c, 0, 0)),
            ],
            out_specs=pl.BlockSpec((1, t_c, Ho, Wo), lambda n, c: (n, c, 0, 0)),
        ),
        compiler_params=pltpu.CompilerParams(
            dimension_semantics=("parallel", "parallel"),
            vmem_limit_bytes=_vmem_limit(per_c * t_c, limit_cap)),
    )(x, wb, shb)


def _depthwise_taps_path(taps, weight, scale, shift, M, C, KT, out_dtype):
    """groups==C with tiny output spatial extent (e.g. GDC 7x7 -> 1x1) or
    stride>1: channels on lanes, per-tap VPU MAC.  taps: (KT, N, C, Ho, Wo)."""
    budget, limit_cap = _vmem_budget()
    patches = taps.transpose(0, 1, 3, 4, 2).reshape(KT, M, C)
    Cp = _round_up(C, 128)

    wt = (weight.reshape(C, KT).astype(jnp.float32) * scale[:, None]).T    # (KT, C)
    wt = jnp.pad(wt, ((0, 0), (0, Cp - C))).reshape(KT, 1, Cp)
    sh = jnp.pad(shift, (0, Cp - C)).reshape(1, Cp)

    out_isz = jnp.dtype(out_dtype).itemsize
    per_row = 2 * KT * Cp * 2 + 2 * Cp * out_isz
    tm = max(8, min(512, _round_up(M, 8)))
    while tm > 8 and tm * per_row > budget:
        tm //= 2
    tm = max(8, (tm // 8) * 8)
    M_pad = _round_up(M, tm)
    patches = jnp.pad(patches,
                      ((0, 0), (0, M_pad - M), (0, Cp - C))).astype(jnp.bfloat16)
    # TODO(synk): for tiny M (GDC), split the grid over channel tiles instead so
    #             both v7x TensorCores get work.

    return pl.pallas_call(
        functools.partial(_dw_taps_kernel, kt=KT),
        out_shape=jax.ShapeDtypeStruct((M_pad, Cp), out_dtype),
        grid_spec=pltpu.PrefetchScalarGridSpec(
            num_scalar_prefetch=0,
            grid=(M_pad // tm,),
            in_specs=[
                pl.BlockSpec((KT, tm, Cp), lambda m: (0, m, 0)),
                pl.BlockSpec((KT, 1, Cp), lambda m: (0, 0, 0)),
                pl.BlockSpec((1, Cp), lambda m: (0, 0)),
            ],
            out_specs=pl.BlockSpec((tm, Cp), lambda m: (m, 0)),
        ),
        compiler_params=pltpu.CompilerParams(
            dimension_semantics=("parallel",),
            vmem_limit_bytes=_vmem_limit(tm * per_row + 4 * KT * Cp * 4, limit_cap)),
    )(patches, wt, sh)                                                   # (M_pad, Cp)


def _grouped_path(taps, weight, scale, shift, M, C, KT, G, cg_in, cg_out, out_dtype):
    """General grouped conv fallback (also groups==1 with kh*kw>1): per-group
    (tm, Kg) x (Kg, cg_out) matmul over materialized im2col patches.
    TODO(synk): pack ceil(128/cg_out) groups per output block for lane-dense
    stores when cg_out << 128 (not needed for MobileFaceNet shapes)."""
    budget, limit_cap = _vmem_budget()
    Kg = cg_in * KT
    out_c = G * cg_out
    patches = taps.transpose(1, 3, 4, 2, 0).reshape(M, G, Kg)

    Kp = _round_up(Kg, 128)
    Cp = _round_up(cg_out, 128)

    wg = weight.reshape(out_c, Kg).reshape(G, cg_out, Kg)
    wg = jnp.pad(wg, ((0, 0), (0, Cp - cg_out), (0, Kp - Kg)))
    wg = wg.transpose(0, 2, 1).astype(jnp.bfloat16)                     # (G, Kp, Cp)
    sc_g = jnp.pad(scale.reshape(G, cg_out),
                   ((0, 0), (0, Cp - cg_out))).reshape(G, 1, Cp)
    sh_g = jnp.pad(shift.reshape(G, cg_out),
                   ((0, 0), (0, Cp - cg_out))).reshape(G, 1, Cp)

    out_isz = jnp.dtype(out_dtype).itemsize
    per_row = 2 * Kp * 2 + 2 * Cp * out_isz
    fixed = 2 * Kp * Cp * 2 + 4 * Cp * 4 * 8
    tm = max(8, min(512, _round_up(M, 8)))
    while tm > 8 and fixed + tm * per_row > budget:
        tm //= 2
    tm = max(8, (tm // 8) * 8)
    M_pad = _round_up(M, tm)

    patches = jnp.pad(patches, ((0, M_pad - M), (0, 0), (0, Kp - Kg)))
    patches = patches.transpose(1, 0, 2).astype(jnp.bfloat16)           # (G, M_pad, Kp)

    out = pl.pallas_call(
        _gmm_bn_kernel,
        out_shape=jax.ShapeDtypeStruct((G, M_pad, Cp), out_dtype),
        grid_spec=pltpu.PrefetchScalarGridSpec(
            num_scalar_prefetch=0,
            grid=(G, M_pad // tm),
            in_specs=[
                pl.BlockSpec((1, tm, Kp), lambda g, m: (g, m, 0)),
                pl.BlockSpec((1, Kp, Cp), lambda g, m: (g, 0, 0)),
                pl.BlockSpec((1, 1, Cp), lambda g, m: (g, 0, 0)),
                pl.BlockSpec((1, 1, Cp), lambda g, m: (g, 0, 0)),
            ],
            out_specs=pl.BlockSpec((1, tm, Cp), lambda g, m: (g, m, 0)),
        ),
        compiler_params=pltpu.CompilerParams(
            dimension_semantics=("parallel", "parallel"),
            vmem_limit_bytes=_vmem_limit(fixed + tm * per_row, limit_cap)),
    )(patches, wg, sc_g, sh_g)
    return out.transpose(1, 0, 2)                                        # (M_pad, G, Cp)


# ------------------------------- forward --------------------------------------

def linear_block_forward(x, weight, gamma, beta, running_mean, running_var,
                         *, stride=(1, 1), padding=(0, 0), groups=1, eps=1e-5,
                         out_dtype=jnp.bfloat16):
    """Conv2d(bias=False, groups) + BatchNorm2d (eval mode).  x: (N,C,H,W) NCHW."""
    N, C, H, W = x.shape
    out_c, cg_in, kh, kw = weight.shape
    sh_, sw_ = stride
    ph, pw = padding
    G = groups
    assert C == cg_in * G and out_c % G == 0
    cg_out = out_c // G
    KT = kh * kw
    Ho = (H + 2 * ph - kh) // sh_ + 1
    Wo = (W + 2 * pw - kw) // sw_ + 1

    # Fold BN (eval mode) into per-out-channel scale/shift (kept in f32; scale
    # is applied in the f32 epilogue of the MXU paths, not baked into bf16
    # weights, so tiny running_var does not lose precision).
    scale = (gamma / jnp.sqrt(running_var + eps)).astype(jnp.float32)
    shift = (beta - running_mean * scale).astype(jnp.float32)
    # TODO(synk): training-mode BN (batch statistics) is not implemented.
    # TODO(synk): BN fold + weight repack can be hoisted out of the per-step
    #             trace by callers that reuse parameters across many forwards.

    if G == 1 and KT == 1:
        # Pointwise Linear_block (the common case): NCHW-native, no im2col, no
        # pre/post transposes or slices around the kernel.
        xe = x
        if ph or pw:
            xe = jnp.pad(xe, ((0, 0), (0, 0), (ph, ph), (pw, pw)))
        if sh_ > 1 or sw_ > 1:
            xe = xe[:, :, ::sh_, ::sw_]
        xe = xe[:, :, :Ho, :Wo]
        return _pointwise_path(xe, weight.reshape(out_c, C), scale, shift,
                               out_c, out_dtype)

    if (G == C and cg_in == 1 and cg_out == 1 and sh_ == 1 and sw_ == 1
            and Ho * Wo >= 256):
        # Depthwise with real spatial extent (e.g. 3x3 dw): fused im2col.
        return _depthwise_fused_path(x, weight, scale, shift, kh, kw, ph, pw,
                                     Ho, Wo, out_dtype)

    # Remaining cases use a materialized tap stack (im2col) in HBM.
    taps, Ho, Wo = _im2col_taps(x, kh, kw, sh_, sw_, ph, pw)
    M = N * Ho * Wo
    if G == C and cg_in == 1 and cg_out == 1:
        # Tiny-output depthwise (GDC 7x7 -> 1x1) or strided depthwise: channels
        # on lanes; the tap stack has ~no duplication when kh*kw ~ H*W.
        out = _depthwise_taps_path(taps, weight, scale, shift, M, C, KT,
                                   out_dtype)[:M, :out_c]
    else:
        # groups==1 with kh*kw>1 and general 1<G<C share the grouped matmul.
        out3d = _grouped_path(taps, weight, scale, shift, M, C, KT, G, cg_in,
                              cg_out, out_dtype)
        out = out3d[:M, :, :cg_out].reshape(M, out_c)
    return out.reshape(N, Ho, Wo, out_c).transpose(0, 3, 1, 2)   # back to NCHW


# ------------------------------- reference / test ------------------------------

def _reference(x, weight, gamma, beta, running_mean, running_var,
               *, stride, padding, groups, eps=1e-5):
    y = lax.conv_general_dilated(
        x, weight, window_strides=stride,
        padding=[(padding[0], padding[0]), (padding[1], padding[1])],
        dimension_numbers=("NCHW", "OIHW", "NCHW"),
        feature_group_count=groups)
    scale = (gamma / jnp.sqrt(running_var + eps)).reshape(1, -1, 1, 1)
    shift = (beta - running_mean * gamma / jnp.sqrt(running_var + eps)).reshape(1, -1, 1, 1)
    return y * scale + shift


def _make_params(key, in_c, out_c, kernel, groups):
    k_w, k_g, k_b, k_m, k_v = jax.random.split(key, 5)
    weight = jax.random.normal(
        k_w, (out_c, in_c // groups, kernel[0], kernel[1]), dtype=jnp.float32) * 0.1
    gamma = 1.0 + 0.1 * jax.random.normal(k_g, (out_c,), dtype=jnp.float32)
    beta = 0.1 * jax.random.normal(k_b, (out_c,), dtype=jnp.float32)
    running_mean = 0.1 * jax.random.normal(k_m, (out_c,), dtype=jnp.float32)
    running_var = jnp.abs(jax.random.normal(k_v, (out_c,), dtype=jnp.float32)) + 0.5
    return weight, gamma, beta, running_mean, running_var


def _run_case(key, *, N, in_c, out_c, H, W, kernel, stride, padding, groups):
    k_x, k_p = jax.random.split(key)
    x = jax.random.normal(k_x, (N, in_c, H, W), dtype=jnp.float32)
    weight, gamma, beta, rm, rv = _make_params(k_p, in_c, out_c, kernel, groups)
    fwd = jax.jit(functools.partial(
        linear_block_forward, stride=stride, padding=padding, groups=groups))
    out = jax.block_until_ready(fwd(x, weight, gamma, beta, rm, rv))
    ref = _reference(x, weight, gamma, beta, rm, rv,
                     stride=stride, padding=padding, groups=groups)
    assert out.shape == ref.shape, (out.shape, ref.shape)
    out_f32 = out.astype(jnp.float32)
    err = float(jnp.max(jnp.abs(out_f32 - ref)))
    # bf16 MXU inputs + bf16 output -> relaxed tolerance vs the f32 reference.
    assert jnp.allclose(out_f32, ref, rtol=5e-2, atol=5e-2), err
    return err


if __name__ == "__main__":
    key = jax.random.PRNGKey(0)
    k1, k2, k3, k4, k5 = jax.random.split(key, 5)

    # 1) default Linear_block config: 1x1 pointwise, groups=1 (NCHW-native path)
    _run_case(k1, N=2, in_c=8, out_c=16, H=16, W=16,
              kernel=(1, 1), stride=(1, 1), padding=(0, 0), groups=1)
    # 2) depthwise 3x3 stride 1 (groups == C): fused-im2col path
    _run_case(k2, N=2, in_c=8, out_c=8, H=16, W=16,
              kernel=(3, 3), stride=(1, 1), padding=(1, 1), groups=8)
    # 3) GDC-style depthwise 7x7 -> 1x1 (groups == C): channels-on-lanes path
    _run_case(k3, N=2, in_c=16, out_c=16, H=7, W=7,
              kernel=(7, 7), stride=(1, 1), padding=(0, 0), groups=16)
    # 4) general grouped 3x3, strided: grouped-matmul fallback
    _run_case(k4, N=2, in_c=8, out_c=16, H=16, W=16,
              kernel=(3, 3), stride=(2, 2), padding=(1, 1), groups=2)
    # 5) pointwise with non-128 spatial, non-multiple-of-8 out channels, N=1
    _run_case(k5, N=1, in_c=8, out_c=12, H=14, W=14,
              kernel=(1, 1), stride=(1, 1), padding=(0, 0), groups=1)

    print("KERNEL_OK")
</pallas_src>

<mosaic_0001>
module attributes {stable_mosaic.version = 11 : i64} {
  func.func @_pw_bn_kernel(%arg0: i32, %arg1: i32, %arg2: i32, %arg3: memref<1x8x256xf32, #tpu.memory_space<vmem>>, %arg4: memref<16x8xbf16, #tpu.memory_space<vmem>>, %arg5: memref<16x1xf32, #tpu.memory_space<vmem>>, %arg6: memref<16x1xf32, #tpu.memory_space<vmem>>, %arg7: memref<1x16x256xbf16, #tpu.memory_space<vmem>>) attributes {dimension_semantics = [#tpu.dimension_semantics<parallel>, #tpu.dimension_semantics<parallel>, #tpu.dimension_semantics<parallel>], iteration_bounds = array<i64: 2, 1, 1>, scalar_prefetch = 0 : i64, scratch_operands = 0 : i64, tpu.core_type = #tpu.core_type<tc>, window_params = [{transform_indices = @transform_0, window_bounds = array<i64: 1, 8, 256>}, {transform_indices = @transform_1, window_bounds = array<i64: 16, 8>}, {transform_indices = @transform_2, window_bounds = array<i64: 16, 1>}, {transform_indices = @transform_3, window_bounds = array<i64: 16, 1>}, {transform_indices = @transform_4, window_bounds = array<i64: 1, 16, 256>}]} {
    %c0 = arith.constant 0 : index
    %c0_0 = arith.constant 0 : index
    %c0_1 = arith.constant 0 : index
    %0 = vector.load %arg3[%c0, %c0_0, %c0_1] : memref<1x8x256xf32, #tpu.memory_space<vmem>>, vector<1x8x256xf32>
    %1 = vector.shape_cast %0 : vector<1x8x256xf32> to vector<8x256xf32>
    %2 = arith.truncf %1 : vector<8x256xf32> to vector<8x256xbf16>
    %c0_2 = arith.constant 0 : index
    %c0_3 = arith.constant 0 : index
    %3 = vector.load %arg4[%c0_2, %c0_3] : memref<16x8xbf16, #tpu.memory_space<vmem>>, vector<16x8xbf16>
    %cst = arith.constant dense<0.000000e+00> : vector<16x256xf32>
    %4 = tpu.matmul %3, %2, %cst {dimension_numbers = #tpu.dot_dimension_numbers<[1], [0], [0], [1], [0, 0, 1, 1], [], []>} : vector<16x8xbf16>, vector<8x256xbf16>, vector<16x256xf32> -> vector<16x256xf32>
    %c0_4 = arith.constant 0 : index
    %c0_5 = arith.constant 0 : index
    %5 = vector.load %arg5[%c0_4, %c0_5] : memref<16x1xf32, #tpu.memory_space<vmem>>, vector<16x1xf32>
    %6 = vector.broadcast %5 : vector<16x1xf32> to vector<16x256xf32>
    %7 = arith.mulf %4, %6 : vector<16x256xf32>
    %c0_6 = arith.constant 0 : index
    %c0_7 = arith.constant 0 : index
    %8 = vector.load %arg6[%c0_6, %c0_7] : memref<16x1xf32, #tpu.memory_space<vmem>>, vector<16x1xf32>
    %9 = vector.broadcast %8 : vector<16x1xf32> to vector<16x256xf32>
    %10 = arith.addf %7, %9 : vector<16x256xf32>
    %11 = arith.truncf %10 : vector<16x256xf32> to vector<16x256xbf16>
    %c0_8 = arith.constant 0 : index
    %c0_9 = arith.constant 0 : index
    %c0_10 = arith.constant 0 : index
    %12 = vector.load %arg7[%c0_8, %c0_9, %c0_10] : memref<1x16x256xbf16, #tpu.memory_space<vmem>>, vector<1x16x256xbf16>
    %13 = vector.shape_cast %12 : vector<1x16x256xbf16> to vector<16x256xbf16>
    %14 = vector.shape_cast %11 : vector<16x256xbf16> to vector<1x16x256xbf16>
    tpu.vector_store %arg7[%c0_8, %c0_9, %c0_10], %14 {strides = array<i32>} : memref<1x16x256xbf16, #tpu.memory_space<vmem>>, vector<1x16x256xbf16>,
    return
  }
  func.func @transform_0(%arg0: i32, %arg1: i32, %arg2: i32) -> (i32, i32, i32) {
    %c0_i32 = arith.constant 0 : i32
    %c0_i32_0 = arith.constant 0 : i32
    return %arg0, %c0_i32, %arg1 : i32, i32, i32
  }
  func.func @transform_1(%arg0: i32, %arg1: i32, %arg2: i32) -> (i32, i32) {
    %c0_i32 = arith.constant 0 : i32
    %c0_i32_0 = arith.constant 0 : i32
    return %arg2, %c0_i32 : i32, i32
  }
  func.func @transform_2(%arg0: i32, %arg1: i32, %arg2: i32) -> (i32, i32) {
    %c0_i32 = arith.constant 0 : i32
    %c0_i32_0 = arith.constant 0 : i32
    return %arg2, %c0_i32 : i32, i32
  }
  func.func @transform_3(%arg0: i32, %arg1: i32, %arg2: i32) -> (i32, i32) {
    %c0_i32 = arith.constant 0 : i32
    %c0_i32_0 = arith.constant 0 : i32
    return %arg2, %c0_i32 : i32, i32
  }
  func.func @transform_4(%arg0: i32, %arg1: i32, %arg2: i32) -> (i32, i32, i32) {
    %c0_i32 = arith.constant 0 : i32
    return %arg0, %arg2, %arg1 : i32, i32, i32
  }
}

</mosaic_0001>

<llo_original>
// kernel: linear_block_forward.1
$region0: #{linear_block_forward.1}
  #allocation0 [shape = 'u32[]', space=smem, size = 0x4, offset = 0x4, fixed_abs, tag = 'smem constant byte address 0x4 - core index']
  #allocation1 [shape = 'u32[144,128]{1,0:T(1,128)}', space=vmem, size = 0x12000, scoped, tag = 'internal scratch']
  %s0 = inlined_call_operand.vmem [shape: f32[2,8,256], index: 0, kind: input, shape index: {}]
  %s1 = inlined_call_operand.vmem [shape: bf16[16,8], index: 1, kind: input, shape index: {}]
  %s2 = inlined_call_operand.vmem [shape: f32[16,1], index: 2, kind: input, shape index: {}]
  %s3 = inlined_call_operand.vmem [shape: f32[16,1], index: 3, kind: input, shape index: {}]
  %s4 = inlined_call_operand.vmem [shape: bf16[2,16,256], index: 4, kind: output, shape index: {}]
  %s5 = sld [smem:[#allocation0]]
  $region49: #{linear_block_forward.1} parent=0
    _
  %s7 = ssub.s32 1, %s5
  %s8 = scalar_select 0, %s7, %s5
  loop: start=0, step=1, limit=4
  $region2: #{linear_block_forward.1} parent=0 // loop_pre_header
    _
  $region3: #{linear_block_forward.1} parent=0 // loop_header
    %s10 = sphi 0, %s14
    %p11 = scmp.ge.s32.totalorder %s10, 4
    %s17 = sphi 0, %s36
    %s18 = sphi 0, %s32
    %s19 = sphi 0, %s28
    %s20 = sphi 0, %s17
    %s21 = sphi 0, %s18
    %s22 = sphi 0, %s19
    %s23 = sphi 0, %s20
    %s24 = sphi 0, %s21
    %s25 = sphi 0, %s22
    %s41 = sphi 0, %s43
    %s44 = sphi 0, %s41
    %s45 = sphi 0, %s44
    %s61 = sphi 0, %s45
    %s67 = sphi 0, %s69
    %s70 = sphi 0, %s67
    %s71 = sphi 0, %s70
    %s87 = sphi 0, %s71
    %s93 = sphi 0, %s95
    %s96 = sphi 0, %s93
    %s97 = sphi 0, %s96
    %s113 = sphi 0, %s97
    %s119 = sphi 0, %s121
    %s122 = sphi 0, %s119
    %s123 = sphi 0, %s122
    %s139 = sphi 0, %s123
    %s149 = sphi 0, %s151
    %s152 = sphi 0, %s149
    %s153 = sphi 0, %s152
    %s169 = sphi 0, %s153
  $region4: #{linear_block_forward.1} parent=0 // loop_header_branch
    %13 = sbr.rel (%p11) target = $region8
  $region5: #{linear_block_forward.1} parent=0 // loop_body
    %s15 = ssub.s32 %s10, 1
    %s16 = ssub.s32 %s10, 2
    %s26 = sadd.s32 1, %s19
    %p27 = scmp.ge.s32.totalorder %s26, 1
    %s28 = scalar_select %p27, 0, %s26
    %s29 = sadd.s32 1, %s18
    %s30 = scalar_select %p27, %s29, %s18
    %p31 = scmp.ge.s32.totalorder %s30, 1
    %s32 = scalar_select %p31, 0, %s30
    %s33 = sadd.s32 1, %s17
    %s34 = scalar_select %p31, %s33, %s17
    %p35 = scmp.ge.s32.totalorder %s34, 2
    %s36 = scalar_select %p35, 0, %s34
    %s37 = ssub.s32 %s17, %s36
    %s38 = ssub.s32 %s18, %s32
    %s39 = sor.u32 %s37, %s38
    %p40 = scmp.eq.s32.totalorder %s39, 0
    %s42 = sadd.s32 %s41, 1
    %s43 = scalar_select %p40, %s41, %s42
    %p46 = pneg %p40
    %p47 = scmp.eq.s32.totalorder %s10, 1
    %p48 = por %p46, %p47
    %p49 = scmp.ne.s32.totalorder %s41, %s44
    %p50 = scmp.eq.s32.totalorder %s10, 0
    %p51 = por %p49, %p50
    %p52 = scmp.ne.s32.totalorder %s41, %s44
    %p53 = scmp.eq.s32.totalorder %s15, 1
    %p54 = por %p52, %p53
    %p55 = scmp.ne.s32.totalorder %s44, %s45
    %p56 = scmp.eq.s32.totalorder %s15, 0
    %p57 = por %p55, %p56
    %p58 = scmp.ne.s32.totalorder %s44, %s45
    %p59 = scmp.eq.s32.totalorder %s16, 1
    %p60 = por %p58, %p59
    %p62 = scmp.ne.s32.totalorder %s45, %s61
    %p63 = scmp.eq.s32.totalorder %s16, 0
    %p64 = por %p62, %p63
    %s65 = ssub.s32 %s19, %s28
    %p66 = scmp.eq.s32.totalorder %s65, 0
    %s68 = sadd.s32 %s67, 1
    %s69 = scalar_select %p66, %s67, %s68
    %p72 = pneg %p66
    %p73 = scmp.eq.s32.totalorder %s10, 1
    %p74 = por %p72, %p73
    %p75 = scmp.ne.s32.totalorder %s67, %s70
    %p76 = scmp.eq.s32.totalorder %s10, 0
    %p77 = por %p75, %p76
    %p78 = scmp.ne.s32.totalorder %s67, %s70
    %p79 = scmp.eq.s32.totalorder %s15, 1
    %p80 = por %p78, %p79
    %p81 = scmp.ne.s32.totalorder %s70, %s71
    %p82 = scmp.eq.s32.totalorder %s15, 0
    %p83 = por %p81, %p82
    %p84 = scmp.ne.s32.totalorder %s70, %s71
    %p85 = scmp.eq.s32.totalorder %s16, 1
    %p86 = por %p84, %p85
    %p88 = scmp.ne.s32.totalorder %s71, %s87
    %p89 = scmp.eq.s32.totalorder %s16, 0
    %p90 = por %p88, %p89
    %s91 = ssub.s32 %s19, %s28
    %p92 = scmp.eq.s32.totalorder %s91, 0
    %s94 = sadd.s32 %s93, 1
    %s95 = scalar_select %p92, %s93, %s94
    %p98 = pneg %p92
    %p99 = scmp.eq.s32.totalorder %s10, 1
    %p100 = por %p98, %p99
    %p101 = scmp.ne.s32.totalorder %s93, %s96
    %p102 = scmp.eq.s32.totalorder %s10, 0
    %p103 = por %p101, %p102
    %p104 = scmp.ne.s32.totalorder %s93, %s96
    %p105 = scmp.eq.s32.totalorder %s15, 1
    %p106 = por %p104, %p105
    %p107 = scmp.ne.s32.totalorder %s96, %s97
    %p108 = scmp.eq.s32.totalorder %s15, 0
    %p109 = por %p107, %p108
    %p110 = scmp.ne.s32.totalorder %s96, %s97
    %p111 = scmp.eq.s32.totalorder %s16, 1
    %p112 = por %p110, %p111
    %p114 = scmp.ne.s32.totalorder %s97, %s113
    %p115 = scmp.eq.s32.totalorder %s16, 0
    %p116 = por %p114, %p115
    %s117 = ssub.s32 %s19, %s28
    %p118 = scmp.eq.s32.totalorder %s117, 0
    %s120 = sadd.s32 %s119, 1
    %s121 = scalar_select %p118, %s119, %s120
    %p124 = pneg %p118
    %p125 = scmp.eq.s32.totalorder %s10, 1
    %p126 = por %p124, %p125
    %p127 = scmp.ne.s32.totalorder %s119, %s122
    %p128 = scmp.eq.s32.totalorder %s10, 0
    %p129 = por %p127, %p128
    %p130 = scmp.ne.s32.totalorder %s119, %s122
    %p131 = scmp.eq.s32.totalorder %s15, 1
    %p132 = por %p130, %p131
    %p133 = scmp.ne.s32.totalorder %s122, %s123
    %p134 = scmp.eq.s32.totalorder %s15, 0
    %p135 = por %p133, %p134
    %p136 = scmp.ne.s32.totalorder %s122, %s123
    %p137 = scmp.eq.s32.totalorder %s16, 1
    %p138 = por %p136, %p137
    %p140 = scmp.ne.s32.totalorder %s123, %s139
    %p141 = scmp.eq.s32.totalorder %s16, 0
    %p142 = por %p140, %p141
    %s143 = ssub.s32 %s17, %s36
    %s144 = ssub.s32 %s19, %s28
    %s145 = sor.u32 %s143, %s144
    %s146 = ssub.s32 %s18, %s32
    %s147 = sor.u32 %s145, %s146
    %p148 = scmp.eq.s32.totalorder %s147, 0
    %s150 = sadd.s32 %s149, 1
    %s151 = scalar_select %p148, %s149, %s150
    %p154 = pneg %p148
    %p155 = scmp.eq.s32.totalorder %s10, 1
    %p156 = por %p154, %p155
    %p157 = scmp.ne.s32.totalorder %s149, %s152
    %p158 = scmp.eq.s32.totalorder %s10, 0
    %p159 = por %p157, %p158
    %p160 = scmp.ne.s32.totalorder %s149, %s152
    %p161 = scmp.eq.s32.totalorder %s15, 1
    %p162 = por %p160, %p161
    %p163 = scmp.ne.s32.totalorder %s152, %s153
    %p164 = scmp.eq.s32.totalorder %s15, 0
    %p165 = por %p163, %p164
    %p166 = scmp.ne.s32.totalorder %s152, %s153
    %p167 = scmp.eq.s32.totalorder %s16, 1
    %p168 = por %p166, %p167
    %p170 = scmp.ne.s32.totalorder %s153, %s169
    %p171 = scmp.eq.s32.totalorder %s16, 0
    %p172 = por %p170, %p171
    %p173 = scmp.le.s32.totalorder 1, %s10
    %p174 = scmp.lt.s32.totalorder %s10, 3
    %p175 = pnand %p173, %p174
    %p176 = pneg %p175
    // Predicated region
    $region9: #{linear_block_forward.1} parent=5 // pred_check
      _
    $region10: #{linear_block_forward.1} parent=5 // pred_check_branch
      %178 = sbr.rel (%p175) target = $region12
    $region11: #{linear_block_forward.1} parent=5 // pred_region
      %s179 = ssub.s32 %s10, 1
      // Predicated region
      $region13: #{linear_block_forward.1} parent=11 // pred_check
        %p180 = pneg %p83
      $region14: #{linear_block_forward.1} parent=11 // pred_check_branch
        %182 = sbr.rel (%p180) target = $region16
      $region15: #{linear_block_forward.1} parent=11 // pred_region
        %s183 = smul.u32 2, %s22
        %p184 = scmp.lt.s32.totalorder %s183, 1
        %s185 = scalar_select %p184, %s183, 1
        %s186 = smul.addr %s185, 4
        %s187 = scalar_lea.vmem %s1, %s186
        %s188 = smul.u32 2, %s22
      $region16: #{linear_block_forward.1} parent=11 // pred_fallthru
        _
      // Predicated region
      $region17: #{linear_block_forward.1} parent=11 // pred_check
        %p189 = pneg %p109
      $region18: #{linear_block_forward.1} parent=11 // pred_check_branch
        %191 = sbr.rel (%p189) target = $region20
      $region19: #{linear_block_forward.1} parent=11 // pred_region
        %s192 = smul.u32 2, %s22
        %p193 = scmp.lt.s32.totalorder %s192, 1
        %s194 = scalar_select %p193, %s192, 1
        %s195 = smul.addr %s194, 8
        %s196 = scalar_lea.vmem %s2, %s195
        %s197 = smul.u32 2, %s22
      $region20: #{linear_block_forward.1} parent=11 // pred_fallthru
        _
      // Predicated region
      $region21: #{linear_block_forward.1} parent=11 // pred_check
        %p198 = pneg %p135
      $region22: #{linear_block_forward.1} parent=11 // pred_check_branch
        %200 = sbr.rel (%p198) target = $region24
      $region23: #{linear_block_forward.1} parent=11 // pred_region
        %s201 = smul.u32 2, %s22
        %p202 = scmp.lt.s32.totalorder %s201, 1
        %s203 = scalar_select %p202, %s201, 1
        %s204 = smul.addr %s203, 8
        %s205 = scalar_lea.vmem %s3, %s204
        %s206 = smul.u32 2, %s22
      $region24: #{linear_block_forward.1} parent=11 // pred_fallthru
        _
    $region12: #{linear_block_forward.1} parent=5 // pred_fallthru
      _
    %p207 = scmp.lt.s32.totalorder %s10, 2
    // Predicated region
    $region25: #{linear_block_forward.1} parent=5 // pred_check
      %p208 = pneg %p207
    $region26: #{linear_block_forward.1} parent=5 // pred_check_branch
      %210 = sbr.rel (%p208) target = $region28
    $region27: #{linear_block_forward.1} parent=5 // pred_region
      // Predicated region
      $region29: #{linear_block_forward.1} parent=27 // pred_check
        %p211 = pneg %p51
      $region30: #{linear_block_forward.1} parent=27 // pred_check_branch
        %213 = sbr.rel (%p211) target = $region32
      $region31: #{linear_block_forward.1} parent=27 // pred_region
        %s214 = smul.u32 2, %s18
        %p215 = scmp.lt.s32.totalorder %s17, 1
        %s216 = scalar_select %p215, %s17, 1
        %p217 = scmp.lt.s32.totalorder %s214, 1
        %s218 = scalar_select %p217, %s214, 1
        %s219 = smul.addr %s216, 2
        %s220 = sadd.s32 %s218, %s219
        %s221 = smul.addr %s220, 8
        %s222 = scalar_lea.vmem %s0, %s221
        %s223 = smul.u32 2, %s18
      $region32: #{linear_block_forward.1} parent=27 // pred_fallthru
        _
    $region28: #{linear_block_forward.1} parent=5 // pred_fallthru
      _
    %p224 = scmp.le.s32.totalorder 1, %s10
    %p225 = scmp.lt.s32.totalorder %s10, 3
    %p226 = pnand %p224, %p225
    %p227 = pneg %p226
    // Predicated region
    $region33: #{linear_block_forward.1} parent=5 // pred_check
      _
    $region34: #{linear_block_forward.1} parent=5 // pred_check_branch
      %229 = sbr.rel (%p226) target = $region36
    $region35: #{linear_block_forward.1} parent=5 // pred_region
      %s230 = ssub.s32 %s10, 1
      %s231 = smul.u32 2, %s21
      %p232 = scmp.lt.s32.totalorder %s20, 1
      %s233 = scalar_select %p232, %s20, 1
      %p234 = scmp.lt.s32.totalorder %s231, 1
      %s235 = scalar_select %p234, %s231, 1
      %s236 = smul.addr %s233, 2
      %s237 = sadd.s32 %s235, %s236
      %s238 = smul.addr %s237, 8
      %s239 = scalar_lea.vmem %s0, %s238
      %p240 = pneg %p57
      %p241 = pneg %p54
      %s242 = smul.u32 2, %s22
      %p243 = scmp.lt.s32.totalorder %s242, 1
      %s244 = scalar_select %p243, %s242, 1
      %s245 = smul.addr %s244, 4
      %s246 = scalar_lea.vmem %s1, %s245
      %p247 = pneg %p83
      %p248 = pneg %p80
      %s249 = smul.u32 2, %s22
      %p250 = scmp.lt.s32.totalorder %s249, 1
      %s251 = scalar_select %p250, %s249, 1
      %s252 = smul.addr %s251, 8
      %s253 = scalar_lea.vmem %s2, %s252
      %p254 = pneg %p109
      %p255 = pneg %p106
      %s256 = smul.u32 2, %s22
      %p257 = scmp.lt.s32.totalorder %s256, 1
      %s258 = scalar_select %p257, %s256, 1
      %s259 = smul.addr %s258, 8
      %s260 = scalar_lea.vmem %s3, %s259
      %p261 = pneg %p135
      %p262 = pneg %p132
      %p263 = pneg %p165
      %p264 = pneg %p162
      %s265 = smul.u32 2, %s22
      %s266 = smul.u32 2, %s21
      %p267 = scmp.lt.s32.totalorder %s20, 1
      %s268 = scalar_select %p267, %s20, 1
      %p269 = scmp.lt.s32.totalorder %s265, 1
      %s270 = scalar_select %p269, %s265, 1
      %p271 = scmp.lt.s32.totalorder %s266, 1
      %s272 = scalar_select %p271, %s266, 1
      %s273 = smul.addr %s270, 2
      %s274 = sadd.s32 %s272, %s273
      %s275 = smul.addr %s268, 4
      %s276 = sadd.s32 %s274, %s275
      %s277 = smul.addr %s276, 4
      %s278 = scalar_lea.vmem %s4, %s277
      %s279 = smul.u32 2, %s21
      %p280 = scmp.lt.s32.totalorder %s20, 1
      %s281 = scalar_select %p280, %s20, 1
      %p282 = scmp.lt.s32.totalorder %s279, 1
      %s283 = scalar_select %p282, %s279, 1
      %s284 = smul.addr %s281, 2
      %s285 = sadd.s32 %s283, %s284
      %s286 = smul.addr %s285, 8
      %s287 = scalar_lea.vmem %s0, %s286
      %s288 = smul.u32 2, %s21
      %s289 = smul.u32 2, %s22
      %p290 = scmp.lt.s32.totalorder %s289, 1
      %s291 = scalar_select %p290, %s289, 1
      %s292 = smul.addr %s291, 4
      %s293 = scalar_lea.vmem %s1, %s292
      %s294 = smul.u32 2, %s22
      %s295 = smul.u32 2, %s22
      %p296 = scmp.lt.s32.totalorder %s295, 1
      %s297 = scalar_select %p296, %s295, 1
      %s298 = smul.addr %s297, 8
      %s299 = scalar_lea.vmem %s2, %s298
      %s300 = smul.u32 2, %s22
      %s301 = smul.u32 2, %s22
      %p302 = scmp.lt.s32.totalorder %s301, 1
      %s303 = scalar_select %p302, %s301, 1
      %s304 = smul.addr %s303, 8
      %s305 = scalar_lea.vmem %s3, %s304
      %s306 = smul.u32 2, %s22
      %s307 = smul.u32 2, %s22
      %s308 = smul.u32 2, %s21
      %p309 = scmp.lt.s32.totalorder %s20, 1
      %s310 = scalar_select %p309, %s20, 1
      %p311 = scmp.lt.s32.totalorder %s307, 1
      %s312 = scalar_select %p311, %s307, 1
      %p313 = scmp.lt.s32.totalorder %s308, 1
      %s314 = scalar_select %p313, %s308, 1
      %s315 = smul.addr %s312, 2
      %s316 = sadd.s32 %s314, %s315
      %s317 = smul.addr %s310, 4
      %s318 = sadd.s32 %s316, %s317
      %s319 = smul.addr %s318, 4
      %s320 = scalar_lea.vmem %s4, %s319
      %s321 = smul.u32 2, %s22
      %s322 = smul.u32 2, %s21
      %v324 = vld [vmem:[%s287] sm:$0xff]
      %v325 = vld [vmem:[%s287 + $0x8] sm:$0xff]
      %v326 = vpack.c.bf16 %v324, %v324
      %v327 = vpack.c.bf16 %v325, %v325
      %v328 = vld [vmem:[%s293] sm:$0xf]
      %v329 = vld [vmem:[%s293 + $0x4] sm:$0xf]
      %v332 = vunpack.c.l.b16 %v328
      %v333 = vunpack.c.l.b16 %v329
      %v334 = vpack.c.b16 %v333, %v332
      %vm335 = vcmask 64512
      %v337 = vsel %vm335, %v334, 0
      %vm339 = vcmask 1043456
      %v341 = vsel %vm339, %v326, 0
      %v344 = vsel %vm339, %v327, 0
      %346 = vmatprep.subr.bf16.mxu0 %v344
      %347 = vmatpush1.bf16.msra.mxu0 %v341
      %348 = vmatprep.subr.bf16.mxu0 0
      %349 = vmatpush1.bf16.msra.mxu0 0
      %350 = vmatprep.subr.bf16.mxu0 0
      %351 = vmatpush1.bf16.msra.mxu0 0
      %352 = vmatprep.subr.bf16.mxu0 0
      %353 = vmatpush1.bf16.msra.mxu0 0
      %354 = vmatprep.subr.bf16.mxu0 0
      %355 = vmatpush1.bf16.msra.mxu0 0
      %356 = vmatprep.subr.bf16.mxu0 0
      %357 = vmatpush1.bf16.msra.mxu0 0
      %358 = vmatprep.subr.bf16.mxu0 0
      %359 = vmatpush1.bf16.msra.mxu0 0
      %360 = vmatprep.subr.bf16.mxu0 0
      %361 = vmatpush1.bf16.msra.mxu0 0
      %362 = vmatprep.subr.bf16.mxu0 0
      %363 = vmatpush1.bf16.msra.mxu0 0
      %364 = vmatprep.subr.bf16.mxu0 0
      %365 = vmatpush1.bf16.msra.mxu0 0
      %366 = vmatprep.subr.bf16.mxu0 0
      %367 = vmatpush1.bf16.msra.mxu0 0
      %368 = vmatprep.subr.bf16.mxu0 0
      %369 = vmatpush1.bf16.msra.mxu0 0
      %370 = vmatprep.subr.bf16.mxu0 0
      %371 = vmatpush1.bf16.msra.mxu0 0
      %372 = vmatprep.subr.bf16.mxu0 0
      %373 = vmatpush1.bf16.msra.mxu0 0
      %374 = vmatprep.subr.bf16.mxu0 0
      %375 = vmatpush1.bf16.msra.mxu0 0
      %376 = vmatprep.subr.bf16.mxu0 0
      %377 = vmatpush1.bf16.msra.mxu0 0
      %378 = vmatprep.mubr.bf16.mxu0 0
      %379 = vmatmul.mubr.bf16.gmra.mrb[0].mxu0 %v337
      %v380 = vpop.f32.mrb[0].mxu0
      %v381 = vadd.f32 0.0, %v380
      %v382 = vpop.f32.mrb[0].mxu0
      %v383 = vadd.f32 0.0, %v382
      %v384 = vpop.f32.mrb[0].mxu0
      %v385 = vadd.f32 0.0, %v384
      %v386 = vpop.f32.mrb[0].mxu0
      %v387 = vadd.f32 0.0, %v386
      %388 = vdwg.mxu0
      %v389 = vld [vmem:[%s299] sm:$0xff]
      %v390 = vld [vmem:[%s299 + $0x8] sm:$0xff]
      %392 = vset.pattern.permute.xlu0 0
      %393 = vperm.xlu0 %392, %v389
      %v394 = vpop.permute.xlu0 %393
      %397 = vset.pattern.permute.xlu0 0
      %398 = vperm.xlu0 %397, %v390
      %v399 = vpop.permute.xlu0 %398
      %v401 = vmul.f32 %v381, %v394
      %v402 = vmul.f32 %v383, %v394
      %v403 = vmul.f32 %v385, %v399
      %v404 = vmul.f32 %v387, %v399
      %v405 = vld [vmem:[%s305] sm:$0xff]
      %v406 = vld [vmem:[%s305 + $0x8] sm:$0xff]
      %408 = vset.pattern.permute.xlu0 0
      %409 = vperm.xlu0 %408, %v405
      %v410 = vpop.permute.xlu0 %409
      %413 = vset.pattern.permute.xlu0 0
      %414 = vperm.xlu0 %413, %v406
      %v415 = vpop.permute.xlu0 %414
      %v417 = vadd.f32 %v401, %v410
      %v418 = vadd.f32 %v402, %v410
      %v419 = vadd.f32 %v403, %v415
      %v420 = vadd.f32 %v404, %v415
      %v421 = vpack.c.bf16 %v419, %v417
      %v422 = vpack.c.bf16 %v420, %v418
      %v425 = vunpack.c.l.b16 %v421
      %v426 = vunpack.c.l.b16 %v422
      %v427 = vunpack.c.h.b16 %v421
      %v428 = vunpack.c.h.b16 %v422
      %v429 = vpack.c.b16 %v426, %v425
      %v430 = vpack.c.b16 %v428, %v427
      %433 = vst [vmem:[%s320] sm:$0xff] %v429
      %434 = vst [vmem:[%s320 + $0x8] sm:$0xff] %v430
      %s435 = smul.u32 2, %s22
      %s436 = smul.u32 2, %s21
      %p437 = scmp.lt.s32.totalorder %s20, 1
      %s438 = scalar_select %p437, %s20, 1
      %p439 = scmp.lt.s32.totalorder %s435, 1
      %s440 = scalar_select %p439, %s435, 1
      %p441 = scmp.lt.s32.totalorder %s436, 1
      %s442 = scalar_select %p441, %s436, 1
      %s443 = smul.addr %s440, 2
      %s444 = sadd.s32 %s442, %s443
      %s445 = smul.addr %s438, 4
      %s446 = sadd.s32 %s444, %s445
      %s447 = smul.addr %s446, 4
      %s448 = scalar_lea.vmem %s4, %s447
      // Predicated region
      $region37: #{linear_block_forward.1} parent=35 // pred_check
        %p449 = pneg %p162
      $region38: #{linear_block_forward.1} parent=35 // pred_check_branch
        %451 = sbr.rel (%p449) target = $region40
      $region39: #{linear_block_forward.1} parent=35 // pred_region
        %s452 = smul.u32 2, %s22
        %s453 = smul.u32 2, %s21
      $region40: #{linear_block_forward.1} parent=35 // pred_fallthru
        _
    $region36: #{linear_block_forward.1} parent=5 // pred_fallthru
      _
    %p454 = scmp.le.s32.totalorder 2, %s10
    // Predicated region
    $region41: #{linear_block_forward.1} parent=5 // pred_check
      %p455 = pneg %p454
    $region42: #{linear_block_forward.1} parent=5 // pred_check_branch
      %457 = sbr.rel (%p455) target = $region44
    $region43: #{linear_block_forward.1} parent=5 // pred_region
      %s458 = ssub.s32 %s10, 2
      // Predicated region
      $region45: #{linear_block_forward.1} parent=43 // pred_check
        %p459 = pneg %p168
      $region46: #{linear_block_forward.1} parent=43 // pred_check_branch
        %461 = sbr.rel (%p459) target = $region48
      $region47: #{linear_block_forward.1} parent=43 // pred_region
        %s462 = smul.u32 2, %s25
        %s463 = smul.u32 2, %s24
        %p464 = scmp.lt.s32.totalorder %s23, 1
        %s465 = scalar_select %p464, %s23, 1
        %p466 = scmp.lt.s32.totalorder %s462, 1
        %s467 = scalar_select %p466, %s462, 1
        %p468 = scmp.lt.s32.totalorder %s463, 1
        %s469 = scalar_select %p468, %s463, 1
        %s470 = smul.addr %s467, 2
        %s471 = sadd.s32 %s469, %s470
        %s472 = smul.addr %s465, 4
        %s473 = sadd.s32 %s471, %s472
        %s474 = smul.addr %s473, 4
        %s475 = scalar_lea.vmem %s4, %s474
      $region48: #{linear_block_forward.1} parent=43 // pred_fallthru
        _
    $region44: #{linear_block_forward.1} parent=5 // pred_fallthru
      _
  $region6: #{linear_block_forward.1} parent=0 // loop_footer
    %s14 = sadd.s32 1, %s10
  $region7: #{linear_block_forward.1} parent=0 // loop_footer_branch
    %9 = sbr.rel target = $region3
  $region8: #{linear_block_forward.1} parent=0 // loop_exit
    _

</llo_original>
